<compile_context>
chip_gen: v6e
topology: v6e:2x2x1
jax: 0.10.0
libtpu: 0.0.40
codegen_flags: <defaults>
</compile_context>

<pallas_src>
import functools

import jax
import jax.numpy as jnp
from jax.experimental import pallas as pl
from jax.experimental.pallas import tpu as pltpu


def _round_up(x, m):
    return ((x + m - 1) // m) * m


def _max_batch_tile():
    # v5e's MXU is 128 wide; M=128 tiles already fill it.  v6e/v7x prefer 256.
    try:
        kind = jax.devices()[0].device_kind.lower()
        if ("v5 lite" in kind) or ("v5e" in kind) or ("v5lite" in kind):
            return 128
    except Exception:
        pass
    return 256


# ---------------------------------------------------------------------------
# Kernel 1: fused  c_dist = 1 - cos_sim(query, key)  +  top-k (smallest, sorted)
# ---------------------------------------------------------------------------
def cdist_topk_kernel(q_ref, kT_ref, kinv_ref, dist_ref, idx_ref, *,
                      eps, sel, p_real):
    q = q_ref[...]                                   # (tb, D), original dtype
    kT = kT_ref[...]                                 # (D, P_pad), pre-transposed

    # Canonical (M,K)x(K,N) MXU matmul, f32 accumulate, full f32 precision.
    dots = jax.lax.dot_general(
        q, kT,
        dimension_numbers=(((1,), (0,)), ((), ())),
        preferred_element_type=jnp.float32,
        precision=jax.lax.Precision.HIGHEST)         # (tb, P_pad)

    # Query norms in f32 (reduction over D); rsqrt lands on the EUP slot.
    qf = q.astype(jnp.float32)
    q_sq = jnp.sum(qf * qf, axis=-1, keepdims=True)  # (tb, 1)
    q_inv = jax.lax.rsqrt(jnp.maximum(q_sq, eps * eps))

    # NOTE: clamp is applied per squared norm (eps^2), equivalent to torch's
    # denominator clamp except for degenerate near-zero vectors.
    dist = 1.0 - dots * (q_inv * kinv_ref[...])      # (tb, P_pad)

    # Mask padded pool columns so they can never be selected.
    lane = jax.lax.broadcasted_iota(jnp.int32, dist.shape, 1)
    big = jnp.float32(1e30)
    dist = jnp.where(lane < p_real, dist, big)

    # S rounds of masked row-min: smallest -> largest, smallest-index tie-break.
    for s in range(sel):
        m = jnp.min(dist, axis=-1, keepdims=True)                     # (tb, 1)
        am = jnp.min(jnp.where(dist == m, lane, dist.shape[-1]),
                     axis=-1, keepdims=True)                          # (tb, 1)
        dist_ref[:, pl.ds(s, 1)] = m
        idx_ref[:, pl.ds(s, 1)] = am
        dist = jnp.where(lane == am, big, dist)


def cosine_distance_topk(query, kT_pad, k_inv, pool_size, selection_size, *,
                         eps=1e-8, tb=None):
    """Returns (dist (B,S) f32 ascending, idx (B,S) int32)."""
    B, D = query.shape
    Dk, P_pad = kT_pad.shape
    assert D == Dk
    S = selection_size

    # Batch tiling: >=4 grid steps when B allows (2 per core on v7x megacore),
    # cap per-generation so double-buffered q tiles stay small.
    b8 = _round_up(B, 8)
    if tb is None:
        if b8 <= 8:
            tb = b8
        else:
            tb = min(_max_batch_tile(), max(8, _round_up(pl.cdiv(b8, 4), 8)))
    B_pad = _round_up(b8, tb)
    q_pad = jnp.pad(query, ((0, B_pad - B), (0, 0)))
    grid = (B_pad // tb,)

    dist, idx = pl.pallas_call(
        functools.partial(cdist_topk_kernel, eps=eps, sel=S, p_real=pool_size),
        out_shape=(jax.ShapeDtypeStruct((B_pad, S), jnp.float32),
                   jax.ShapeDtypeStruct((B_pad, S), jnp.int32)),
        grid_spec=pltpu.PrefetchScalarGridSpec(
            num_scalar_prefetch=0,
            grid=grid,
            in_specs=[
                pl.BlockSpec((tb, D), lambda i: (i, 0)),
                pl.BlockSpec((D, P_pad), lambda i: (0, 0)),   # resident key^T
                pl.BlockSpec((1, P_pad), lambda i: (0, 0)),   # resident 1/||k||
            ],
            out_specs=[
                pl.BlockSpec((tb, S), lambda i: (i, 0)),
                pl.BlockSpec((tb, S), lambda i: (i, 0)),
            ],
        ),
        compiler_params=pltpu.CompilerParams(
            dimension_semantics=("parallel",)),
    )(q_pad, kT_pad, k_inv)

    return dist[:B], idx[:B]


# ---------------------------------------------------------------------------
# Kernel 2: selection[r] = prompts[topk_flat[r]]  (VMEM-resident pool gather)
# ---------------------------------------------------------------------------
def gather_kernel(idx_ref, pool_ref, o_ref):
    # idx_ref : (n_pad,) int32 in SMEM (scalar prefetch)
    # pool_ref: (P, 1, L*D) full prompt pool, resident in VMEM (constant block)
    # o_ref   : (tn, L*D) flattened, lane-dense output tile
    tn = o_ref.shape[0]
    base = pl.program_id(0) * tn
    # Fully unrolled copy loop: static destination offsets, dynamic leading-dim
    # source reads -> LLO interleaves sld / vld / vst across rows.
    for r in range(tn):
        p = idx_ref[base + r]
        o_ref[pl.ds(r, 1)] = pool_ref[p]             # (1, L*D) row copy


def gather_prompts(prompts, topk_flat, *, tn=None):
    P, L, D = prompts.shape
    LD = L * D
    n = topk_flat.shape[0]                            # B * selection_size

    # Pool as (P, 1, L*D): dynamic row index hits the (untiled) leading dim.
    pool3 = prompts.reshape(P, 1, LD)

    n8 = _round_up(n, 8)
    if tn is None:
        tn = n8 if n8 <= 8 else min(64, max(8, _round_up(pl.cdiv(n8, 2), 8)))
    n_pad = _round_up(n8, tn)
    idx = jnp.zeros((n_pad,), jnp.int32).at[:n].set(topk_flat.astype(jnp.int32))
    grid = (n_pad // tn,)

    out = pl.pallas_call(
        gather_kernel,
        out_shape=jax.ShapeDtypeStruct((n_pad, LD), prompts.dtype),
        grid_spec=pltpu.PrefetchScalarGridSpec(
            num_scalar_prefetch=1,
            grid=grid,
            in_specs=[
                # whole pool, constant block index -> fetched once, stays in VMEM
                pl.BlockSpec((P, 1, LD), lambda i, idx: (0, 0, 0)),
            ],
            out_specs=pl.BlockSpec((tn, LD), lambda i, idx: (i, 0)),
        ),
        compiler_params=pltpu.CompilerParams(
            dimension_semantics=("parallel",)),
    )(idx, pool3)
    return out[:n].reshape(n, L, D)


# ---------------------------------------------------------------------------
# Prompt module (forward pass)
# ---------------------------------------------------------------------------
class Prompt:
    def __init__(self, pool_size=10, selection_size=5, prompt_len=5,
                 dimension=768, _diversed_selection=True,
                 _batchwise_selection=False, *, rng_key, eps=1e-8):
        self.pool_size = pool_size
        self.selection_size = selection_size
        self.prompt_len = prompt_len
        self.dimension = dimension
        self.eps = eps
        # TODO(synk): _diversed_selection / _batchwise_selection alter top-k in
        # other Prompt variants; the provided reference forward() ignores them.
        self._diversed_selection = _diversed_selection
        self._batchwise_selection = _batchwise_selection

        k1, k2 = jax.random.split(rng_key)
        # torch.nn.init.uniform_(-1, 1) on both parameters
        self.key = jax.random.uniform(
            k1, (pool_size, dimension), jnp.float32, minval=-1.0, maxval=1.0)
        self.prompts = jax.random.uniform(
            k2, (pool_size, prompt_len, dimension), jnp.float32,
            minval=-1.0, maxval=1.0)

        # ---- cached, key-only precompute (hoisted out of every forward) ----
        # Lane-dense pool padding (padded columns are masked off in-kernel),
        # canonical (K, N) key operand, and key inverse norms.
        P_pad = _round_up(pool_size, 128)
        k_pad = jnp.pad(self.key, ((0, P_pad - pool_size), (0, 0))
                        ).astype(jnp.float32)
        self._kT_pad = k_pad.T                                       # (D, P_pad)
        self._k_inv = jax.lax.rsqrt(
            jnp.maximum(jnp.sum(k_pad * k_pad, axis=-1), eps * eps)
        ).reshape(1, P_pad)                                          # (1, P_pad)

    def __call__(self, query):
        B, D = query.shape
        assert D == self.dimension, (
            f"Query dimension {D} does not Cdist prompt dimension {self.dimension}")

        # Fused cosine-distance + top-k (smallest S, sorted ascending) -- kernel 1
        distance, topk = cosine_distance_topk(
            query, self._kT_pad, self._k_inv,
            self.pool_size, self.selection_size, eps=self.eps)        # (B,S),(B,S)

        # Gather selected prompts -- kernel 2 (VMEM-resident pool, dense stores)
        topk_flat = topk.reshape(-1)                                   # (B*S,)
        selection = gather_prompts(self.prompts, topk_flat)            # (B*S,L,D)
        selection = selection.reshape(
            B, self.selection_size, self.prompt_len, self.dimension)

        return jnp.mean(distance), selection


# ---------------------------------------------------------------------------
# Pure-JAX reference (sanity check)
# ---------------------------------------------------------------------------
def reference_forward(query, key, prompts, selection_size):
    q = query.astype(jnp.float32)
    k = key.astype(jnp.float32)
    dots = jnp.dot(q, k.T, precision=jax.lax.Precision.HIGHEST)
    qn = jnp.linalg.norm(q, axis=-1, keepdims=True)
    kn = jnp.linalg.norm(k, axis=-1, keepdims=True)
    c_dist = 1.0 - dots / jnp.maximum(qn * kn.T, 1e-8)
    neg_vals, topk = jax.lax.top_k(-c_dist, selection_size)
    distance = -neg_vals
    selection = prompts[topk]                 # (B, S, L, D)
    return distance.mean(), selection


if __name__ == "__main__":
    # small, forward-consistent shapes
    B, POOL, SEL, PLEN, DIM = 2, 10, 5, 5, 32

    root = jax.random.PRNGKey(0)
    k_params, k_query = jax.random.split(root)

    module = Prompt(pool_size=POOL, selection_size=SEL, prompt_len=PLEN,
                    dimension=DIM, rng_key=k_params)
    query = jax.random.normal(k_query, (B, DIM), jnp.float32)

    mean_dist, selection = module(query)
    mean_dist = jax.block_until_ready(mean_dist)
    selection = jax.block_until_ready(selection)

    # sanity check against pure-JAX reference
    ref_mean, ref_sel = reference_forward(query, module.key, module.prompts, SEL)
    assert selection.shape == (B, SEL, PLEN, DIM), selection.shape
    assert jnp.allclose(mean_dist, ref_mean, atol=1e-5), (mean_dist, ref_mean)
    assert jnp.allclose(selection, ref_sel, atol=1e-6)

    print("KERNEL_OK")
</pallas_src>

<mosaic_0001>
module attributes {stable_mosaic.version = 11 : i64} {
  func.func @cdist_topk_kernel(%arg0: i32, %arg1: memref<8x32xf32, #tpu.memory_space<vmem>>, %arg2: memref<32x128xf32, #tpu.memory_space<vmem>>, %arg3: memref<1x128xf32, #tpu.memory_space<vmem>>, %arg4: memref<8x5xf32, #tpu.memory_space<vmem>>, %arg5: memref<8x5xi32, #tpu.memory_space<vmem>>) attributes {dimension_semantics = [#tpu.dimension_semantics<parallel>], iteration_bounds = array<i64: 1>, scalar_prefetch = 0 : i64, scratch_operands = 0 : i64, tpu.core_type = #tpu.core_type<tc>, window_params = [{transform_indices = @transform_0, window_bounds = array<i64: 8, 32>}, {pipeline_mode = #tpu.pipeline_mode<synchronous>, transform_indices = @transform_1, window_bounds = array<i64: 32, 128>}, {pipeline_mode = #tpu.pipeline_mode<synchronous>, transform_indices = @transform_2, window_bounds = array<i64: 1, 128>}, {transform_indices = @transform_3, window_bounds = array<i64: 8, 5>}, {transform_indices = @transform_4, window_bounds = array<i64: 8, 5>}]} {
    %c0 = arith.constant 0 : index
    %c0_0 = arith.constant 0 : index
    %0 = vector.load %arg1[%c0, %c0_0] : memref<8x32xf32, #tpu.memory_space<vmem>>, vector<8x32xf32>
    %c0_1 = arith.constant 0 : index
    %c0_2 = arith.constant 0 : index
    %1 = vector.load %arg2[%c0_1, %c0_2] : memref<32x128xf32, #tpu.memory_space<vmem>>, vector<32x128xf32>
    %cst = arith.constant dense<0.000000e+00> : vector<8x128xf32>
    %2 = tpu.matmul %0, %1, %cst {dimension_numbers = #tpu.dot_dimension_numbers<[1], [0], [0], [1], [0, 0, 1, 1], [], []>, precision = #tpu.contract_precision<fp32>} : vector<8x32xf32>, vector<32x128xf32>, vector<8x128xf32> -> vector<8x128xf32>
    %3 = arith.mulf %0, %0 : vector<8x32xf32>
    %cst_3 = arith.constant dense<0.000000e+00> : vector<8xf32>
    %4 = vector.multi_reduction <add>, %3, %cst_3 [1] : vector<8x32xf32> to vector<8xf32>
    %5 = vector.shape_cast %4 : vector<8xf32> to vector<8x1xf32>
    %cst_4 = arith.constant 1.000000e-16 : f32
    %6 = vector.broadcast %cst_4 : f32 to vector<8x1xf32>
    %7 = arith.maximumf %5, %6 : vector<8x1xf32>
    %8 = math.rsqrt %7 : vector<8x1xf32>
    %c0_5 = arith.constant 0 : index
    %c0_6 = arith.constant 0 : index
    %9 = vector.load %arg3[%c0_5, %c0_6] : memref<1x128xf32, #tpu.memory_space<vmem>>, vector<1x128xf32>
    %10 = vector.broadcast %8 : vector<8x1xf32> to vector<8x128xf32>
    %11 = vector.broadcast %9 : vector<1x128xf32> to vector<8x128xf32>
    %12 = arith.mulf %10, %11 : vector<8x128xf32>
    %13 = arith.mulf %2, %12 : vector<8x128xf32>
    %cst_7 = arith.constant 1.000000e+00 : f32
    %14 = vector.broadcast %cst_7 : f32 to vector<8x128xf32>
    %15 = arith.subf %14, %13 : vector<8x128xf32>
    %16 = tpu.iota {dimensions = array<i32: 1>} : vector<8x128xi32>
    %c10_i32 = arith.constant 10 : i32
    %17 = vector.broadcast %c10_i32 : i32 to vector<8x128xi32>
    %18 = arith.cmpi slt, %16, %17 : vector<8x128xi32>
    %cst_8 = arith.constant 1.000000e+30 : f32
    %19 = vector.broadcast %cst_8 : f32 to vector<8x128xf32>
    %20 = arith.select %18, %15, %19 : vector<8x128xi1>, vector<8x128xf32>
    %cst_9 = arith.constant dense<0x7F800000> : vector<8xf32>
    %21 = vector.multi_reduction <minimumf>, %20, %cst_9 [1] : vector<8x128xf32> to vector<8xf32>
    %22 = vector.shape_cast %21 : vector<8xf32> to vector<8x1xf32>
    %23 = vector.broadcast %22 : vector<8x1xf32> to vector<8x128xf32>
    %24 = arith.cmpf oeq, %20, %23 : vector<8x128xf32>
    %c128_i32 = arith.constant 128 : i32
    %25 = vector.broadcast %c128_i32 : i32 to vector<8x128xi32>
    %26 = arith.select %24, %16, %25 : vector<8x128xi1>, vector<8x128xi32>
    %cst_10 = arith.constant dense<2147483647> : vector<8xi32>
    %27 = vector.multi_reduction <minsi>, %26, %cst_10 [1] : vector<8x128xi32> to vector<8xi32>
    %28 = vector.shape_cast %27 : vector<8xi32> to vector<8x1xi32>
    %c0_11 = arith.constant 0 : index
    %c0_12 = arith.constant 0 : index
    %29 = vector.load %arg4[%c0_11, %c0_12] : memref<8x5xf32, #tpu.memory_space<vmem>>, vector<8x1xf32>
    tpu.vector_store %arg4[%c0_11, %c0_12], %22 {strides = array<i32>} : memref<8x5xf32, #tpu.memory_space<vmem>>, vector<8x1xf32>,
    %c0_13 = arith.constant 0 : index
    %c0_14 = arith.constant 0 : index
    %30 = vector.load %arg5[%c0_13, %c0_14] : memref<8x5xi32, #tpu.memory_space<vmem>>, vector<8x1xi32>
    tpu.vector_store %arg5[%c0_13, %c0_14], %28 {strides = array<i32>} : memref<8x5xi32, #tpu.memory_space<vmem>>, vector<8x1xi32>,
    %31 = vector.broadcast %28 : vector<8x1xi32> to vector<8x128xi32>
    %32 = arith.cmpi eq, %16, %31 : vector<8x128xi32>
    %cst_15 = arith.constant 1.000000e+30 : f32
    %33 = vector.broadcast %cst_15 : f32 to vector<8x128xf32>
    %34 = arith.select %32, %33, %20 : vector<8x128xi1>, vector<8x128xf32>
    %cst_16 = arith.constant dense<0x7F800000> : vector<8xf32>
    %35 = vector.multi_reduction <minimumf>, %34, %cst_16 [1] : vector<8x128xf32> to vector<8xf32>
    %36 = vector.shape_cast %35 : vector<8xf32> to vector<8x1xf32>
    %37 = vector.broadcast %36 : vector<8x1xf32> to vector<8x128xf32>
    %38 = arith.cmpf oeq, %34, %37 : vector<8x128xf32>
    %c128_i32_17 = arith.constant 128 : i32
    %39 = vector.broadcast %c128_i32_17 : i32 to vector<8x128xi32>
    %40 = arith.select %38, %16, %39 : vector<8x128xi1>, vector<8x128xi32>
    %cst_18 = arith.constant dense<2147483647> : vector<8xi32>
    %41 = vector.multi_reduction <minsi>, %40, %cst_18 [1] : vector<8x128xi32> to vector<8xi32>
    %42 = vector.shape_cast %41 : vector<8xi32> to vector<8x1xi32>
    %c0_19 = arith.constant 0 : index
    %c1 = arith.constant 1 : index
    %43 = vector.load %arg4[%c0_19, %c1] : memref<8x5xf32, #tpu.memory_space<vmem>>, vector<8x1xf32>
    tpu.vector_store %arg4[%c0_19, %c1], %36 {strides = array<i32>} : memref<8x5xf32, #tpu.memory_space<vmem>>, vector<8x1xf32>,
    %c0_20 = arith.constant 0 : index
    %c1_21 = arith.constant 1 : index
    %44 = vector.load %arg5[%c0_20, %c1_21] : memref<8x5xi32, #tpu.memory_space<vmem>>, vector<8x1xi32>
    tpu.vector_store %arg5[%c0_20, %c1_21], %42 {strides = array<i32>} : memref<8x5xi32, #tpu.memory_space<vmem>>, vector<8x1xi32>,
    %45 = vector.broadcast %42 : vector<8x1xi32> to vector<8x128xi32>
    %46 = arith.cmpi eq, %16, %45 : vector<8x128xi32>
    %cst_22 = arith.constant 1.000000e+30 : f32
    %47 = vector.broadcast %cst_22 : f32 to vector<8x128xf32>
    %48 = arith.select %46, %47, %34 : vector<8x128xi1>, vector<8x128xf32>
    %cst_23 = arith.constant dense<0x7F800000> : vector<8xf32>
    %49 = vector.multi_reduction <minimumf>, %48, %cst_23 [1] : vector<8x128xf32> to vector<8xf32>
    %50 = vector.shape_cast %49 : vector<8xf32> to vector<8x1xf32>
    %51 = vector.broadcast %50 : vector<8x1xf32> to vector<8x128xf32>
    %52 = arith.cmpf oeq, %48, %51 : vector<8x128xf32>
    %c128_i32_24 = arith.constant 128 : i32
    %53 = vector.broadcast %c128_i32_24 : i32 to vector<8x128xi32>
    %54 = arith.select %52, %16, %53 : vector<8x128xi1>, vector<8x128xi32>
    %cst_25 = arith.constant dense<2147483647> : vector<8xi32>
    %55 = vector.multi_reduction <minsi>, %54, %cst_25 [1] : vector<8x128xi32> to vector<8xi32>
    %56 = vector.shape_cast %55 : vector<8xi32> to vector<8x1xi32>
    %c0_26 = arith.constant 0 : index
    %c2 = arith.constant 2 : index
    %57 = vector.load %arg4[%c0_26, %c2] : memref<8x5xf32, #tpu.memory_space<vmem>>, vector<8x1xf32>
    tpu.vector_store %arg4[%c0_26, %c2], %50 {strides = array<i32>} : memref<8x5xf32, #tpu.memory_space<vmem>>, vector<8x1xf32>,
    %c0_27 = arith.constant 0 : index
    %c2_28 = arith.constant 2 : index
    %58 = vector.load %arg5[%c0_27, %c2_28] : memref<8x5xi32, #tpu.memory_space<vmem>>, vector<8x1xi32>
    tpu.vector_store %arg5[%c0_27, %c2_28], %56 {strides = array<i32>} : memref<8x5xi32, #tpu.memory_space<vmem>>, vector<8x1xi32>,
    %59 = vector.broadcast %56 : vector<8x1xi32> to vector<8x128xi32>
    %60 = arith.cmpi eq, %16, %59 : vector<8x128xi32>
    %cst_29 = arith.constant 1.000000e+30 : f32
    %61 = vector.broadcast %cst_29 : f32 to vector<8x128xf32>
    %62 = arith.select %60, %61, %48 : vector<8x128xi1>, vector<8x128xf32>
    %cst_30 = arith.constant dense<0x7F800000> : vector<8xf32>
    %63 = vector.multi_reduction <minimumf>, %62, %cst_30 [1] : vector<8x128xf32> to vector<8xf32>
    %64 = vector.shape_cast %63 : vector<8xf32> to vector<8x1xf32>
    %65 = vector.broadcast %64 : vector<8x1xf32> to vector<8x128xf32>
    %66 = arith.cmpf oeq, %62, %65 : vector<8x128xf32>
    %c128_i32_31 = arith.constant 128 : i32
    %67 = vector.broadcast %c128_i32_31 : i32 to vector<8x128xi32>
    %68 = arith.select %66, %16, %67 : vector<8x128xi1>, vector<8x128xi32>
    %cst_32 = arith.constant dense<2147483647> : vector<8xi32>
    %69 = vector.multi_reduction <minsi>, %68, %cst_32 [1] : vector<8x128xi32> to vector<8xi32>
    %70 = vector.shape_cast %69 : vector<8xi32> to vector<8x1xi32>
    %c0_33 = arith.constant 0 : index
    %c3 = arith.constant 3 : index
    %71 = vector.load %arg4[%c0_33, %c3] : memref<8x5xf32, #tpu.memory_space<vmem>>, vector<8x1xf32>
    tpu.vector_store %arg4[%c0_33, %c3], %64 {strides = array<i32>} : memref<8x5xf32, #tpu.memory_space<vmem>>, vector<8x1xf32>,
    %c0_34 = arith.constant 0 : index
    %c3_35 = arith.constant 3 : index
    %72 = vector.load %arg5[%c0_34, %c3_35] : memref<8x5xi32, #tpu.memory_space<vmem>>, vector<8x1xi32>
    tpu.vector_store %arg5[%c0_34, %c3_35], %70 {strides = array<i32>} : memref<8x5xi32, #tpu.memory_space<vmem>>, vector<8x1xi32>,
    %73 = vector.broadcast %70 : vector<8x1xi32> to vector<8x128xi32>
    %74 = arith.cmpi eq, %16, %73 : vector<8x128xi32>
    %cst_36 = arith.constant 1.000000e+30 : f32
    %75 = vector.broadcast %cst_36 : f32 to vector<8x128xf32>
    %76 = arith.select %74, %75, %62 : vector<8x128xi1>, vector<8x128xf32>
    %cst_37 = arith.constant dense<0x7F800000> : vector<8xf32>
    %77 = vector.multi_reduction <minimumf>, %76, %cst_37 [1] : vector<8x128xf32> to vector<8xf32>
    %78 = vector.shape_cast %77 : vector<8xf32> to vector<8x1xf32>
    %79 = vector.broadcast %78 : vector<8x1xf32> to vector<8x128xf32>
    %80 = arith.cmpf oeq, %76, %79 : vector<8x128xf32>
    %c128_i32_38 = arith.constant 128 : i32
    %81 = vector.broadcast %c128_i32_38 : i32 to vector<8x128xi32>
    %82 = arith.select %80, %16, %81 : vector<8x128xi1>, vector<8x128xi32>
    %cst_39 = arith.constant dense<2147483647> : vector<8xi32>
    %83 = vector.multi_reduction <minsi>, %82, %cst_39 [1] : vector<8x128xi32> to vector<8xi32>
    %84 = vector.shape_cast %83 : vector<8xi32> to vector<8x1xi32>
    %c0_40 = arith.constant 0 : index
    %c4 = arith.constant 4 : index
    %85 = vector.load %arg4[%c0_40, %c4] : memref<8x5xf32, #tpu.memory_space<vmem>>, vector<8x1xf32>
    tpu.vector_store %arg4[%c0_40, %c4], %78 {strides = array<i32>} : memref<8x5xf32, #tpu.memory_space<vmem>>, vector<8x1xf32>,
    %c0_41 = arith.constant 0 : index
    %c4_42 = arith.constant 4 : index
    %86 = vector.load %arg5[%c0_41, %c4_42] : memref<8x5xi32, #tpu.memory_space<vmem>>, vector<8x1xi32>
    tpu.vector_store %arg5[%c0_41, %c4_42], %84 {strides = array<i32>} : memref<8x5xi32, #tpu.memory_space<vmem>>, vector<8x1xi32>,
    return
  }
  func.func @transform_0(%arg0: i32) -> (i32, i32) {
    %c0_i32 = arith.constant 0 : i32
    %c0_i32_0 = arith.constant 0 : i32
    return %arg0, %c0_i32 : i32, i32
  }
  func.func @transform_1(%arg0: i32) -> (i32, i32) {
    %c0_i32 = arith.constant 0 : i32
    %c0_i32_0 = arith.constant 0 : i32
    %c0_i32_1 = arith.constant 0 : i32
    return %c0_i32, %c0_i32_0 : i32, i32
  }
  func.func @transform_2(%arg0: i32) -> (i32, i32) {
    %c0_i32 = arith.constant 0 : i32
    %c0_i32_0 = arith.constant 0 : i32
    %c0_i32_1 = arith.constant 0 : i32
    return %c0_i32, %c0_i32_0 : i32, i32
  }
  func.func @transform_3(%arg0: i32) -> (i32, i32) {
    %c0_i32 = arith.constant 0 : i32
    %c0_i32_0 = arith.constant 0 : i32
    return %arg0, %c0_i32 : i32, i32
  }
  func.func @transform_4(%arg0: i32) -> (i32, i32) {
    %c0_i32 = arith.constant 0 : i32
    %c0_i32_0 = arith.constant 0 : i32
    return %arg0, %c0_i32 : i32, i32
  }
}

</mosaic_0001>

<llo_original>
// kernel: tpu_custom_call.1
$region0: #{tpu_custom_call.1}
  #allocation0 [shape = 'u32[]', space=smem, size = 0x4, offset = 0x4, fixed_abs, tag = 'smem constant byte address 0x4 - core index']
  #allocation1 [shape = 'u32[144,128]{1,0:T(1,128)}', space=vmem, size = 0x12000, scoped, tag = 'internal scratch']
  %s0 = inlined_call_operand.hbm [shape: f32[8,32], index: 0, kind: input, shape index: {}]
  %s1 = inlined_call_operand.hbm [shape: f32[32,128], index: 1, kind: input, shape index: {}]
  %s2 = inlined_call_operand.vmem [shape: f32[1,128], index: 2, kind: input, shape index: {}]
  %s3 = inlined_call_operand.hbm [shape: f32[8,5], index: 3, kind: output, shape index: {0}]
  %s4 = inlined_call_operand.hbm [shape: s32[8,5], index: 4, kind: output, shape index: {1}]
  %5 = xla_tuple %s3, %s4
  %s6 = sld [smem:[#allocation0]]
  $region38: #{tpu_custom_call.1} parent=0
    _
  %s8 = ssub.s32 1, %s6
  %s9 = scalar_select 0, %s8, %s6
  $region1: #{tpu_custom_call.1} parent=0
    #allocation2 [shape = 'u8[4096]{0}', space=vmem, size = 0x1000, scoped, tag = 'input window, operand 0, single buffered']
    #allocation3 [shape = 's32[1]{0}', space=sflag, size = 0x4, scoped, tag = 'scoped memory for tpu_custom_call.1']
    #allocation4 [shape = 's32[1]{0}', space=sflag, size = 0x4, scoped, tag = 'scoped memory for tpu_custom_call.1']
    #allocation5 [shape = 'u8[16384]{0}', space=vmem, size = 0x4000, scoped, tag = 'input window, operand 1, single buffered']
    #allocation6 [shape = 's32[1]{0}', space=sflag, size = 0x4, scoped, tag = 'scoped memory for tpu_custom_call.1']
    #allocation7 [shape = 'u8[4096]{0}', space=vmem, size = 0x1000, scoped, tag = 'output window, operand 0, single buffered']
    #allocation8 [shape = 'u8[4096]{0}', space=vmem, size = 0x1000, scoped, tag = 'output window, operand 1, single buffered']
    #allocation9 [shape = 's32[1]{0}', space=sflag, size = 0x4, scoped, tag = 'scoped memory for tpu_custom_call.1']
    %10 = vsyncpa [#allocation3], 0
    %11 = vsyncpa [#allocation6], 0
    %12 = vsyncpa [#allocation4], 0
    %13 = vsyncpa [#allocation9], 0
    // Predicated region
    $region2: #{tpu_custom_call.1} parent=1 // pred_check
      _
    $region3: #{tpu_custom_call.1} parent=1 // pred_check_branch
      %15 = sbr.rel (0) target = $region5
    $region4: #{tpu_custom_call.1} parent=1 // pred_region
      %s17 = ssub.s32 128, 128
      %18 = vsyncadd [#allocation3], %s17
      %s20 = sshll.u32 [#allocation2], 4
      %s21 = int_to_ptr.vmem [resolvable:$true] %s20
      %23 = dma.hbm_to_vmem [thread:$0]  %s0, 128, %s21, [#allocation3]
    $region5: #{tpu_custom_call.1} parent=1 // pred_fallthru
      _
    // Predicated region
    $region6: #{tpu_custom_call.1} parent=1 // pred_check
      _
    $region7: #{tpu_custom_call.1} parent=1 // pred_check_branch
      %25 = sbr.rel (0) target = $region9
    $region8: #{tpu_custom_call.1} parent=1 // pred_region
      %s27 = ssub.s32 512, 512
      %28 = vsyncadd [#allocation6], %s27
      %s29 = sshll.u32 [#allocation5], 4
      %s30 = int_to_ptr.vmem [resolvable:$true] %s29
      %35 = dma.hbm_to_vmem [thread:$0]  %s1, 512, %s30, [#allocation6], 128, 128, 8
    $region9: #{tpu_custom_call.1} parent=1 // pred_fallthru
      _
    // Predicated region
    $region10: #{tpu_custom_call.1} parent=1 // pred_check
      _
    $region11: #{tpu_custom_call.1} parent=1 // pred_check_branch
      %37 = sbr.rel (0) target = $region13
    $region12: #{tpu_custom_call.1} parent=1 // pred_region
      _
    $region13: #{tpu_custom_call.1} parent=1 // pred_fallthru
      _
    // Predicated region
    $region14: #{tpu_custom_call.1} parent=1 // pred_check
      _
    $region15: #{tpu_custom_call.1} parent=1 // pred_check_branch
      %39 = sbr.rel (0) target = $region17
    $region16: #{tpu_custom_call.1} parent=1 // pred_region
      %40 = dma.done [#allocation3], 128
    $region17: #{tpu_custom_call.1} parent=1 // pred_fallthru
      _
    // Predicated region
    $region18: #{tpu_custom_call.1} parent=1 // pred_check
      _
    $region19: #{tpu_custom_call.1} parent=1 // pred_check_branch
      %42 = sbr.rel (0) target = $region21
    $region20: #{tpu_custom_call.1} parent=1 // pred_region
      %43 = dma.done [#allocation6], 512
    $region21: #{tpu_custom_call.1} parent=1 // pred_fallthru
      _
    %v44 = vld [vmem:[#allocation2] sm:$0xff]
    %v45 = vld [vmem:[#allocation5] sm:$0xff]
    %v46 = vld [vmem:[#allocation5 + $0x8] sm:$0xff]
    %v47 = vld [vmem:[#allocation5 + $0x10] sm:$0xff]
    %v48 = vld [vmem:[#allocation5 + $0x18] sm:$0xff]
    %vm49 = vcmask 261120
    %v51 = vsel %vm49, %v44, 0
    %53 = vmatprep.subr.mxu0 0.0
    %54 = vmatpush1.msra.mxu0 0.0
    %55 = vmatprep.subr.mxu0 0.0
    %56 = vmatpush1.msra.mxu0 0.0
    %57 = vmatprep.subr.mxu0 0.0
    %58 = vmatpush1.msra.mxu0 0.0
    %59 = vmatprep.subr.mxu0 0.0
    %60 = vmatpush1.msra.mxu0 0.0
    %61 = vmatprep.subr.mxu0 0.0
    %62 = vmatpush1.msra.mxu0 0.0
    %63 = vmatprep.subr.mxu0 0.0
    %64 = vmatpush1.msra.mxu0 0.0
    %65 = vmatprep.subr.mxu0 0.0
    %66 = vmatpush1.msra.mxu0 0.0
    %67 = vmatprep.subr.mxu0 0.0
    %68 = vmatpush1.msra.mxu0 0.0
    %69 = vmatprep.subr.mxu0 0.0
    %70 = vmatpush1.msra.mxu0 0.0
    %71 = vmatprep.subr.mxu0 0.0
    %72 = vmatpush1.msra.mxu0 0.0
    %73 = vmatprep.subr.mxu0 0.0
    %74 = vmatpush1.msra.mxu0 0.0
    %75 = vmatprep.subr.mxu0 0.0
    %76 = vmatpush1.msra.mxu0 0.0
    %77 = vmatprep.subr.mxu0 0.0
    %v78 = vand.u32 %v48, 4294901760
    %79 = vmatpush1.msra.mxu0 %v78
    %80 = vmatprep.subr.mxu0 0.0
    %v81 = vand.u32 %v47, 4294901760
    %82 = vmatpush1.msra.mxu0 %v81
    %83 = vmatprep.subr.mxu0 0.0
    %v84 = vand.u32 %v46, 4294901760
    %85 = vmatpush1.msra.mxu0 %v84
    %86 = vmatprep.subr.mxu0 0.0
    %v87 = vand.u32 %v45, 4294901760
    %88 = vmatpush1.msra.mxu0 %v87
    %89 = vmatprep.subr.mxu0 0.0
    %90 = vmatpush2.msra.mxu0 0.0
    %91 = vmatprep.subr.mxu0 0.0
    %92 = vmatpush2.msra.mxu0 0.0
    %93 = vmatprep.subr.mxu0 0.0
    %94 = vmatpush2.msra.mxu0 0.0
    %95 = vmatprep.subr.mxu0 0.0
    %96 = vmatpush2.msra.mxu0 0.0
    %97 = vmatprep.subr.mxu0 0.0
    %98 = vmatpush2.msra.mxu0 0.0
    %99 = vmatprep.subr.mxu0 0.0
    %100 = vmatpush2.msra.mxu0 0.0
    %101 = vmatprep.subr.mxu0 0.0
    %102 = vmatpush2.msra.mxu0 0.0
    %103 = vmatprep.subr.mxu0 0.0
    %104 = vmatpush2.msra.mxu0 0.0
    %105 = vmatprep.subr.mxu0 0.0
    %106 = vmatpush2.msra.mxu0 0.0
    %107 = vmatprep.subr.mxu0 0.0
    %108 = vmatpush2.msra.mxu0 0.0
    %109 = vmatprep.subr.mxu0 0.0
    %110 = vmatpush2.msra.mxu0 0.0
    %111 = vmatprep.subr.mxu0 0.0
    %112 = vmatpush2.msra.mxu0 0.0
    %113 = vmatprep.subr.mxu0 0.0
    %114 = vmatpush2.msra.mxu0 0.0
    %115 = vmatprep.subr.mxu0 0.0
    %116 = vmatpush2.msra.mxu0 0.0
    %117 = vmatprep.subr.mxu0 0.0
    %118 = vmatpush2.msra.mxu0 0.0
    %119 = vmatprep.subr.mxu0 0.0
    %120 = vmatpush2.msra.mxu0 0.0
    %121 = vmatprep.mubr.f32.mxu0 0.0
    %v122 = vand.u32 %v51, 4294901760
    %v123 = vsub.f32 %v51, %v122
    %v124 = vand.u32 %v123, 4294901760
    %v125 = vsub.f32 %v123, %v124
    %v126 = vand.u32 %v125, 4294901760
    %127 = vmatmul.mubr.f32.gmra.mxu0 %v126
    %v128 = vpop.f32.mrf.mxu0
    %v129 = vadd.f32 0.0, %v128
    %v130 = vpop.f32.mrf.mxu0
    %131 = vdwg.mxu0
    %132 = vmatprep.subr.mxu0 0.0
    %133 = vmatpush1.msra.mxu0 0.0
    %134 = vmatprep.subr.mxu0 0.0
    %135 = vmatpush1.msra.mxu0 0.0
    %136 = vmatprep.subr.mxu0 0.0
    %137 = vmatpush1.msra.mxu0 0.0
    %138 = vmatprep.subr.mxu0 0.0
    %139 = vmatpush1.msra.mxu0 0.0
    %140 = vmatprep.subr.mxu0 0.0
    %141 = vmatpush1.msra.mxu0 0.0
    %142 = vmatprep.subr.mxu0 0.0
    %143 = vmatpush1.msra.mxu0 0.0
    %144 = vmatprep.subr.mxu0 0.0
    %145 = vmatpush1.msra.mxu0 0.0
    %146 = vmatprep.subr.mxu0 0.0
    %147 = vmatpush1.msra.mxu0 0.0
    %148 = vmatprep.subr.mxu0 0.0
    %149 = vmatpush1.msra.mxu0 0.0
    %150 = vmatprep.subr.mxu0 0.0
    %151 = vmatpush1.msra.mxu0 0.0
    %152 = vmatprep.subr.mxu0 0.0
    %153 = vmatpush1.msra.mxu0 0.0
    %154 = vmatprep.subr.mxu0 0.0
    %155 = vmatpush1.msra.mxu0 0.0
    %156 = vmatprep.subr.mxu0 0.0
    %v157 = vand.u32 %v48, 4294901760
    %v158 = vsub.f32 %v48, %v157
    %v159 = vand.u32 %v158, 4294901760
    %v160 = vsub.f32 %v158, %v159
    %v161 = vand.u32 %v160, 4294901760
    %162 = vmatpush1.msra.mxu0 %v161
    %163 = vmatprep.subr.mxu0 0.0
    %v164 = vand.u32 %v47, 4294901760
    %v165 = vsub.f32 %v47, %v164
    %v166 = vand.u32 %v165, 4294901760
    %v167 = vsub.f32 %v165, %v166
    %v168 = vand.u32 %v167, 4294901760
    %169 = vmatpush1.msra.mxu0 %v168
    %170 = vmatprep.subr.mxu0 0.0
    %v171 = vand.u32 %v46, 4294901760
    %v172 = vsub.f32 %v46, %v171
    %v173 = vand.u32 %v172, 4294901760
    %v174 = vsub.f32 %v172, %v173
    %v175 = vand.u32 %v174, 4294901760
    %176 = vmatpush1.msra.mxu0 %v175
    %177 = vmatprep.subr.mxu0 0.0
    %v178 = vand.u32 %v45, 4294901760
    %v179 = vsub.f32 %v45, %v178
    %v180 = vand.u32 %v179, 4294901760
    %v181 = vsub.f32 %v179, %v180
    %v182 = vand.u32 %v181, 4294901760
    %183 = vmatpush1.msra.mxu0 %v182
    %184 = vmatprep.subr.mxu0 0.0
    %185 = vmatpush2.msra.mxu0 0.0
    %186 = vmatprep.subr.mxu0 0.0
    %187 = vmatpush2.msra.mxu0 0.0
    %188 = vmatprep.subr.mxu0 0.0
    %189 = vmatpush2.msra.mxu0 0.0
    %190 = vmatprep.subr.mxu0 0.0
    %191 = vmatpush2.msra.mxu0 0.0
    %192 = vmatprep.subr.mxu0 0.0
    %193 = vmatpush2.msra.mxu0 0.0
    %194 = vmatprep.subr.mxu0 0.0
    %195 = vmatpush2.msra.mxu0 0.0
    %196 = vmatprep.subr.mxu0 0.0
    %197 = vmatpush2.msra.mxu0 0.0
    %198 = vmatprep.subr.mxu0 0.0
    %199 = vmatpush2.msra.mxu0 0.0
    %200 = vmatprep.subr.mxu0 0.0
    %201 = vmatpush2.msra.mxu0 0.0
    %202 = vmatprep.subr.mxu0 0.0
    %203 = vmatpush2.msra.mxu0 0.0
    %204 = vmatprep.subr.mxu0 0.0
    %205 = vmatpush2.msra.mxu0 0.0
    %206 = vmatprep.subr.mxu0 0.0
    %207 = vmatpush2.msra.mxu0 0.0
    %208 = vmatprep.subr.mxu0 0.0
    %209 = vmatpush2.msra.mxu0 0.0
    %210 = vmatprep.subr.mxu0 0.0
    %211 = vmatpush2.msra.mxu0 0.0
    %212 = vmatprep.subr.mxu0 0.0
    %213 = vmatpush2.msra.mxu0 0.0
    %214 = vmatprep.subr.mxu0 0.0
    %215 = vmatpush2.msra.mxu0 0.0
    %216 = vmatprep.mubr.f32.mxu0 0.0
    %v217 = vand.u32 %v51, 4294901760
    %218 = vmatmul.mubr.f32.gmra.mxu0 %v217
    %v219 = vpop.f32.mrf.mxu0
    %v220 = vadd.f32 %v129, %v219
    %v221 = vpop.f32.mrf.mxu0
    %222 = vdwg.mxu0
    %223 = vmatprep.subr.mxu0 0.0
    %224 = vmatpush1.msra.mxu0 0.0
    %225 = vmatprep.subr.mxu0 0.0
    %226 = vmatpush1.msra.mxu0 0.0
    %227 = vmatprep.subr.mxu0 0.0
    %228 = vmatpush1.msra.mxu0 0.0
    %229 = vmatprep.subr.mxu0 0.0
    %230 = vmatpush1.msra.mxu0 0.0
    %231 = vmatprep.subr.mxu0 0.0
    %232 = vmatpush1.msra.mxu0 0.0
    %233 = vmatprep.subr.mxu0 0.0
    %234 = vmatpush1.msra.mxu0 0.0
    %235 = vmatprep.subr.mxu0 0.0
    %236 = vmatpush1.msra.mxu0 0.0
    %237 = vmatprep.subr.mxu0 0.0
    %238 = vmatpush1.msra.mxu0 0.0
    %239 = vmatprep.subr.mxu0 0.0
    %240 = vmatpush1.msra.mxu0 0.0
    %241 = vmatprep.subr.mxu0 0.0
    %242 = vmatpush1.msra.mxu0 0.0
    %243 = vmatprep.subr.mxu0 0.0
    %244 = vmatpush1.msra.mxu0 0.0
    %245 = vmatprep.subr.mxu0 0.0
    %246 = vmatpush1.msra.mxu0 0.0
    %247 = vmatprep.subr.mxu0 0.0
    %v248 = vand.u32 %v48, 4294901760
    %v249 = vsub.f32 %v48, %v248
    %250 = vmatpush1.msra.mxu0 %v249
    %251 = vmatprep.subr.mxu0 0.0
    %v252 = vand.u32 %v47, 4294901760
    %v253 = vsub.f32 %v47, %v252
    %254 = vmatpush1.msra.mxu0 %v253
    %255 = vmatprep.subr.mxu0 0.0
    %v256 = vand.u32 %v46, 4294901760
    %v257 = vsub.f32 %v46, %v256
    %258 = vmatpush1.msra.mxu0 %v257
    %259 = vmatprep.subr.mxu0 0.0
    %v260 = vand.u32 %v45, 4294901760
    %v261 = vsub.f32 %v45, %v260
    %262 = vmatpush1.msra.mxu0 %v261
    %263 = vmatprep.subr.mxu0 0.0
    %264 = vmatpush2.msra.mxu0 0.0
    %265 = vmatprep.subr.mxu0 0.0
    %266 = vmatpush2.msra.mxu0 0.0
    %267 = vmatprep.subr.mxu0 0.0
    %268 = vmatpush2.msra.mxu0 0.0
    %269 = vmatprep.subr.mxu0 0.0
    %270 = vmatpush2.msra.mxu0 0.0
    %271 = vmatprep.subr.mxu0 0.0
    %272 = vmatpush2.msra.mxu0 0.0
    %273 = vmatprep.subr.mxu0 0.0
    %274 = vmatpush2.msra.mxu0 0.0
    %275 = vmatprep.subr.mxu0 0.0
    %276 = vmatpush2.msra.mxu0 0.0
    %277 = vmatprep.subr.mxu0 0.0
    %278 = vmatpush2.msra.mxu0 0.0
    %279 = vmatprep.subr.mxu0 0.0
    %280 = vmatpush2.msra.mxu0 0.0
    %281 = vmatprep.subr.mxu0 0.0
    %282 = vmatpush2.msra.mxu0 0.0
    %283 = vmatprep.subr.mxu0 0.0
    %284 = vmatpush2.msra.mxu0 0.0
    %285 = vmatprep.subr.mxu0 0.0
    %286 = vmatpush2.msra.mxu0 0.0
    %287 = vmatprep.subr.mxu0 0.0
    %288 = vmatpush2.msra.mxu0 0.0
    %289 = vmatprep.subr.mxu0 0.0
    %290 = vmatpush2.msra.mxu0 0.0
    %291 = vmatprep.subr.mxu0 0.0
    %292 = vmatpush2.msra.mxu0 0.0
    %293 = vmatprep.subr.mxu0 0.0
    %294 = vmatpush2.msra.mxu0 0.0
    %295 = vmatprep.mubr.f32.mxu0 0.0
    %v296 = vand.u32 %v51, 4294901760
    %v297 = vsub.f32 %v51, %v296
    %298 = vmatmul.mubr.f32.gmra.mxu0 %v297
    %v299 = vpop.f32.mrf.mxu0
    %v300 = vadd.f32 %v220, %v299
    %v301 = vpop.f32.mrf.mxu0
    %302 = vdwg.mxu0
    %303 = vmatprep.subr.mxu0 0.0
    %304 = vmatpush1.msra.mxu0 0.0
    %305 = vmatprep.subr.mxu0 0.0
    %306 = vmatpush1.msra.mxu0 0.0
    %307 = vmatprep.subr.mxu0 0.0
    %308 = vmatpush1.msra.mxu0 0.0
    %309 = vmatprep.subr.mxu0 0.0
    %310 = vmatpush1.msra.mxu0 0.0
    %311 = vmatprep.subr.mxu0 0.0
    %312 = vmatpush1.msra.mxu0 0.0
    %313 = vmatprep.subr.mxu0 0.0
    %314 = vmatpush1.msra.mxu0 0.0
    %315 = vmatprep.subr.mxu0 0.0
    %316 = vmatpush1.msra.mxu0 0.0
    %317 = vmatprep.subr.mxu0 0.0
    %318 = vmatpush1.msra.mxu0 0.0
    %319 = vmatprep.subr.mxu0 0.0
    %320 = vmatpush1.msra.mxu0 0.0
    %321 = vmatprep.subr.mxu0 0.0
    %322 = vmatpush1.msra.mxu0 0.0
    %323 = vmatprep.subr.mxu0 0.0
    %324 = vmatpush1.msra.mxu0 0.0
    %325 = vmatprep.subr.mxu0 0.0
    %326 = vmatpush1.msra.mxu0 0.0
    %327 = vmatprep.subr.mxu0 0.0
    %v328 = vand.u32 %v48, 4294901760
    %329 = vmatpush1.msra.mxu0 %v328
    %330 = vmatprep.subr.mxu0 0.0
    %v331 = vand.u32 %v47, 4294901760
    %332 = vmatpush1.msra.mxu0 %v331
    %333 = vmatprep.subr.mxu0 0.0
    %v334 = vand.u32 %v46, 4294901760
    %335 = vmatpush1.msra.mxu0 %v334
    %336 = vmatprep.subr.mxu0 0.0
    %v337 = vand.u32 %v45, 4294901760
    %338 = vmatpush1.msra.mxu0 %v337
    %339 = vmatprep.subr.mxu0 0.0
    %340 = vmatpush2.msra.mxu0 0.0
    %341 = vmatprep.subr.mxu0 0.0
    %342 = vmatpush2.msra.mxu0 0.0
    %343 = vmatprep.subr.mxu0 0.0
    %344 = vmatpush2.msra.mxu0 0.0
    %345 = vmatprep.subr.mxu0 0.0
    %346 = vmatpush2.msra.mxu0 0.0
    %347 = vmatprep.subr.mxu0 0.0
    %348 = vmatpush2.msra.mxu0 0.0
    %349 = vmatprep.subr.mxu0 0.0
    %350 = vmatpush2.msra.mxu0 0.0
    %351 = vmatprep.subr.mxu0 0.0
    %352 = vmatpush2.msra.mxu0 0.0
    %353 = vmatprep.subr.mxu0 0.0
    %354 = vmatpush2.msra.mxu0 0.0
    %355 = vmatprep.subr.mxu0 0.0
    %356 = vmatpush2.msra.mxu0 0.0
    %357 = vmatprep.subr.mxu0 0.0
    %358 = vmatpush2.msra.mxu0 0.0
    %359 = vmatprep.subr.mxu0 0.0
    %360 = vmatpush2.msra.mxu0 0.0
    %361 = vmatprep.subr.mxu0 0.0
    %362 = vmatpush2.msra.mxu0 0.0
    %363 = vmatprep.subr.mxu0 0.0
    %364 = vmatpush2.msra.mxu0 0.0
    %365 = vmatprep.subr.mxu0 0.0
    %366 = vmatpush2.msra.mxu0 0.0
    %367 = vmatprep.subr.mxu0 0.0
    %368 = vmatpush2.msra.mxu0 0.0
    %369 = vmatprep.subr.mxu0 0.0
    %370 = vmatpush2.msra.mxu0 0.0
    %371 = vmatprep.mubr.f32.mxu0 0.0
    %v372 = vand.u32 %v51, 4294901760
    %v373 = vsub.f32 %v51, %v372
    %v374 = vand.u32 %v373, 4294901760
    %375 = vmatmul.mubr.f32.gmra.mxu0 %v374
    %v376 = vpop.f32.mrf.mxu0
    %v377 = vadd.f32 %v300, %v376
    %v378 = vpop.f32.mrf.mxu0
    %379 = vdwg.mxu0
    %380 = vmatprep.subr.mxu0 0.0
    %381 = vmatpush1.msra.mxu0 0.0
    %382 = vmatprep.subr.mxu0 0.0
    %383 = vmatpush1.msra.mxu0 0.0
    %384 = vmatprep.subr.mxu0 0.0
    %385 = vmatpush1.msra.mxu0 0.0
    %386 = vmatprep.subr.mxu0 0.0
    %387 = vmatpush1.msra.mxu0 0.0
    %388 = vmatprep.subr.mxu0 0.0
    %389 = vmatpush1.msra.mxu0 0.0
    %390 = vmatprep.subr.mxu0 0.0
    %391 = vmatpush1.msra.mxu0 0.0
    %392 = vmatprep.subr.mxu0 0.0
    %393 = vmatpush1.msra.mxu0 0.0
    %394 = vmatprep.subr.mxu0 0.0
    %395 = vmatpush1.msra.mxu0 0.0
    %396 = vmatprep.subr.mxu0 0.0
    %397 = vmatpush1.msra.mxu0 0.0
    %398 = vmatprep.subr.mxu0 0.0
    %399 = vmatpush1.msra.mxu0 0.0
    %400 = vmatprep.subr.mxu0 0.0
    %401 = vmatpush1.msra.mxu0 0.0
    %402 = vmatprep.subr.mxu0 0.0
    %403 = vmatpush1.msra.mxu0 0.0
    %404 = vmatprep.subr.mxu0 0.0
    %v405 = vand.u32 %v48, 4294901760
    %v406 = vsub.f32 %v48, %v405
    %v407 = vand.u32 %v406, 4294901760
    %408 = vmatpush1.msra.mxu0 %v407
    %409 = vmatprep.subr.mxu0 0.0
    %v410 = vand.u32 %v47, 4294901760
    %v411 = vsub.f32 %v47, %v410
    %v412 = vand.u32 %v411, 4294901760
    %413 = vmatpush1.msra.mxu0 %v412
    %414 = vmatprep.subr.mxu0 0.0
    %v415 = vand.u32 %v46, 4294901760
    %v416 = vsub.f32 %v46, %v415
    %v417 = vand.u32 %v416, 4294901760
    %418 = vmatpush1.msra.mxu0 %v417
    %419 = vmatprep.subr.mxu0 0.0
    %v420 = vand.u32 %v45, 4294901760
    %v421 = vsub.f32 %v45, %v420
    %v422 = vand.u32 %v421, 4294901760
    %423 = vmatpush1.msra.mxu0 %v422
    %424 = vmatprep.subr.mxu0 0.0
    %425 = vmatpush2.msra.mxu0 0.0
    %426 = vmatprep.subr.mxu0 0.0
    %427 = vmatpush2.msra.mxu0 0.0
    %428 = vmatprep.subr.mxu0 0.0
    %429 = vmatpush2.msra.mxu0 0.0
    %430 = vmatprep.subr.mxu0 0.0
    %431 = vmatpush2.msra.mxu0 0.0
    %432 = vmatprep.subr.mxu0 0.0
    %433 = vmatpush2.msra.mxu0 0.0
    %434 = vmatprep.subr.mxu0 0.0
    %435 = vmatpush2.msra.mxu0 0.0
    %436 = vmatprep.subr.mxu0 0.0
    %437 = vmatpush2.msra.mxu0 0.0
    %438 = vmatprep.subr.mxu0 0.0
    %439 = vmatpush2.msra.mxu0 0.0
    %440 = vmatprep.subr.mxu0 0.0
    %441 = vmatpush2.msra.mxu0 0.0
    %442 = vmatprep.subr.mxu0 0.0
    %443 = vmatpush2.msra.mxu0 0.0
    %444 = vmatprep.subr.mxu0 0.0
    %445 = vmatpush2.msra.mxu0 0.0
    %446 = vmatprep.subr.mxu0 0.0
    %447 = vmatpush2.msra.mxu0 0.0
    %448 = vmatprep.subr.mxu0 0.0
    %449 = vmatpush2.msra.mxu0 0.0
    %450 = vmatprep.subr.mxu0 0.0
    %451 = vmatpush2.msra.mxu0 0.0
    %452 = vmatprep.subr.mxu0 0.0
    %453 = vmatpush2.msra.mxu0 0.0
    %454 = vmatprep.subr.mxu0 0.0
    %455 = vmatpush2.msra.mxu0 0.0
    %456 = vmatprep.mubr.f32.mxu0 0.0
    %v457 = vand.u32 %v51, 4294901760
    %458 = vmatmul.mubr.f32.gmra.mxu0 %v457
    %v459 = vpop.f32.mrf.mxu0
    %v460 = vadd.f32 %v377, %v459
    %v461 = vpop.f32.mrf.mxu0
    %462 = vdwg.mxu0
    %463 = vmatprep.subr.mxu0 0.0
    %464 = vmatpush1.msra.mxu0 0.0
    %465 = vmatprep.subr.mxu0 0.0
    %466 = vmatpush1.msra.mxu0 0.0
    %467 = vmatprep.subr.mxu0 0.0
    %468 = vmatpush1.msra.mxu0 0.0
    %469 = vmatprep.subr.mxu0 0.0
    %470 = vmatpush1.msra.mxu0 0.0
    %471 = vmatprep.subr.mxu0 0.0
    %472 = vmatpush1.msra.mxu0 0.0
    %473 = vmatprep.subr.mxu0 0.0
    %474 = vmatpush1.msra.mxu0 0.0
    %475 = vmatprep.subr.mxu0 0.0
    %476 = vmatpush1.msra.mxu0 0.0
    %477 = vmatprep.subr.mxu0 0.0
    %478 = vmatpush1.msra.mxu0 0.0
    %479 = vmatprep.subr.mxu0 0.0
    %480 = vmatpush1.msra.mxu0 0.0
    %481 = vmatprep.subr.mxu0 0.0
    %482 = vmatpush1.msra.mxu0 0.0
    %483 = vmatprep.subr.mxu0 0.0
    %484 = vmatpush1.msra.mxu0 0.0
    %485 = vmatprep.subr.mxu0 0.0
    %486 = vmatpush1.msra.mxu0 0.0
    %487 = vmatprep.subr.mxu0 0.0
    %v488 = vand.u32 %v48, 4294901760
    %489 = vmatpush1.msra.mxu0 %v488
    %490 = vmatprep.subr.mxu0 0.0
    %v491 = vand.u32 %v47, 4294901760
    %492 = vmatpush1.msra.mxu0 %v491
    %493 = vmatprep.subr.mxu0 0.0
    %v494 = vand.u32 %v46, 4294901760
    %495 = vmatpush1.msra.mxu0 %v494
    %496 = vmatprep.subr.mxu0 0.0
    %v497 = vand.u32 %v45, 4294901760
    %498 = vmatpush1.msra.mxu0 %v497
    %499 = vmatprep.subr.mxu0 0.0
    %500 = vmatpush2.msra.mxu0 0.0
    %501 = vmatprep.subr.mxu0 0.0
    %502 = vmatpush2.msra.mxu0 0.0
    %503 = vmatprep.subr.mxu0 0.0
    %504 = vmatpush2.msra.mxu0 0.0
    %505 = vmatprep.subr.mxu0 0.0
    %506 = vmatpush2.msra.mxu0 0.0
    %507 = vmatprep.subr.mxu0 0.0
    %508 = vmatpush2.msra.mxu0 0.0
    %509 = vmatprep.subr.mxu0 0.0
    %510 = vmatpush2.msra.mxu0 0.0
    %511 = vmatprep.subr.mxu0 0.0
    %512 = vmatpush2.msra.mxu0 0.0
    %513 = vmatprep.subr.mxu0 0.0
    %514 = vmatpush2.msra.mxu0 0.0
    %515 = vmatprep.subr.mxu0 0.0
    %516 = vmatpush2.msra.mxu0 0.0
    %517 = vmatprep.subr.mxu0 0.0
    %518 = vmatpush2.msra.mxu0 0.0
    %519 = vmatprep.subr.mxu0 0.0
    %520 = vmatpush2.msra.mxu0 0.0
    %521 = vmatprep.subr.mxu0 0.0
    %522 = vmatpush2.msra.mxu0 0.0
    %523 = vmatprep.subr.mxu0 0.0
    %524 = vmatpush2.msra.mxu0 0.0
    %525 = vmatprep.subr.mxu0 0.0
    %526 = vmatpush2.msra.mxu0 0.0
    %527 = vmatprep.subr.mxu0 0.0
    %528 = vmatpush2.msra.mxu0 0.0
    %529 = vmatprep.subr.mxu0 0.0
    %530 = vmatpush2.msra.mxu0 0.0
    %531 = vmatprep.mubr.f32.mxu0 0.0
    %v532 = vand.u32 %v51, 4294901760
    %533 = vmatmul.mubr.f32.gmra.mxu0 %v532
    %v534 = vpop.f32.mrf.mxu0
    %v535 = vadd.f32 %v460, %v534
    %v536 = vpop.f32.mrf.mxu0
    %537 = vdwg.mxu0
    %v538 = vmul.f32 %v44, %v44
    %v539 = vsel %vm49, %v538, 0.0
    %540 = vadd.xlane.f32.xlu0 %v539
    %v541 = vpop.xlane.xlu0 %540
    %v542 = vmax.f32 %v541, 1e-16
    %v543 = vrsqrt.pop %v542
    %v544 = vld [vmem:[%s2] sm:$0x1]
    %v546 = vlaneseq
    %v547 = vshrl.u32 %v546, 7
    %v548 = vsub.s32 0, %v547
    %v549 = vrot.slane %v544, %v548
    %v551 = vmul.f32 %v543, %v549
    %v552 = vmul.f32 %v535, %v551
    %v553 = vsub.f32 1.0, %v552
    %v554 = vlaneseq
    %v555 = vand.u32 %v554, 127
    %vm556 = vcmp.lt.s32.totalorder %v555, 10
    %v557 = vsel %vm556, %v553, 1e+30
    %558 = vmin.xlane.f32.xlu0 %v557
    %v559 = vpop.xlane.xlu0 %558
    %vm560 = vcmp.eq.f32.partialorder %v557, %v559
    %v561 = vsel %vm560, %v555, 128
    %v562 = vand.u32 %v561, 65535
    %v563 = vshra.s32 %v561, 16
    %v564 = vcvt.s32.f32 %v562
    %v565 = vcvt.s32.f32 %v563
    %566 = vmin.xlane.f32.xlu0 %v565
    %v567 = vpop.xlane.xlu0 %566
    %vm568 = vcmp.eq.f32.partialorder %v565, %v567
    %v569 = vsel %vm568, %v564, inf
    %570 = vmin.xlane.f32.xlu0 %v569
    %v571 = vpop.xlane.xlu0 %570
    %v572 = vcvt.f32.s32 %v571
    %v573 = vcvt.f32.s32 %v567
    %v574 = vshll.u32 %v573, 16
    %v575 = vadd.s32 %v574, %v572
    %vm576 = vcmask 7168
    %577 = vst.msk [vmem:[#allocation7] sm:$0xff] %vm576, %v559
    %578 = vst.msk [vmem:[#allocation8] sm:$0xff] %vm576, %v575
    %vm579 = vcmp.eq.s32.totalorder %v555, %v575
    %v580 = vsel %vm579, 1e+30, %v557
    %581 = vmin.xlane.f32.xlu0 %v580
    %v582 = vpop.xlane.xlu0 %581
    %vm583 = vcmp.eq.f32.partialorder %v580, %v582
    %v584 = vsel %vm583, %v555, 128
    %v585 = vand.u32 %v584, 65535
    %v586 = vshra.s32 %v584, 16
    %v587 = vcvt.s32.f32 %v585
    %v588 = vcvt.s32.f32 %v586
    %589 = vmin.xlane.f32.xlu0 %v588
    %v590 = vpop.xlane.xlu0 %589
    %vm591 = vcmp.eq.f32.partialorder %v588, %v590
    %v592 = vsel %vm591, %v587, inf
    %593 = vmin.xlane.f32.xlu0 %v592
    %v594 = vpop.xlane.xlu0 %593
    %v595 = vcvt.f32.s32 %v594
    %v596 = vcvt.f32.s32 %v590
    %v597 = vshll.u32 %v596, 16
    %v598 = vadd.s32 %v597, %v595
    %vm599 = vcmask 15368
    %600 = vst.msk [vmem:[#allocation7] sm:$0xff] %vm599, %v582
    %601 = vst.msk [vmem:[#allocation8] sm:$0xff] %vm599, %v598
    %vm602 = vcmp.eq.s32.totalorder %v555, %v598
    %v603 = vsel %vm602, 1e+30, %v580
    %604 = vmin.xlane.f32.xlu0 %v603
    %v605 = vpop.xlane.xlu0 %604
    %vm606 = vcmp.eq.f32.partialorder %v603, %v605
    %v607 = vsel %vm606, %v555, 128
    %v608 = vand.u32 %v607, 65535
    %v609 = vshra.s32 %v607, 16
    %v610 = vcvt.s32.f32 %v608
    %v611 = vcvt.s32.f32 %v609
    %612 = vmin.xlane.f32.xlu0 %v611
    %v613 = vpop.xlane.xlu0 %612
    %vm614 = vcmp.eq.f32.partialorder %v611, %v613
    %v615 = vsel %vm614, %v610, inf
    %616 = vmin.xlane.f32.xlu0 %v615
    %v617 = vpop.xlane.xlu0 %616
    %v618 = vcvt.f32.s32 %v617
    %v619 = vcvt.f32.s32 %v613
    %v620 = vshll.u32 %v619, 16
    %v621 = vadd.s32 %v620, %v618
    %vm622 = vcmask 23568
    %623 = vst.msk [vmem:[#allocation7] sm:$0xff] %vm622, %v605
    %624 = vst.msk [vmem:[#allocation8] sm:$0xff] %vm622, %v621
    %vm625 = vcmp.eq.s32.totalorder %v555, %v621
    %v626 = vsel %vm625, 1e+30, %v603
    %627 = vmin.xlane.f32.xlu0 %v626
    %v628 = vpop.xlane.xlu0 %627
    %vm629 = vcmp.eq.f32.partialorder %v626, %v628
    %v630 = vsel %vm629, %v555, 128
    %v631 = vand.u32 %v630, 65535
    %v632 = vshra.s32 %v630, 16
    %v633 = vcvt.s32.f32 %v631
    %v634 = vcvt.s32.f32 %v632
    %635 = vmin.xlane.f32.xlu0 %v634
    %v636 = vpop.xlane.xlu0 %635
    %vm637 = vcmp.eq.f32.partialorder %v634, %v636
    %v638 = vsel %vm637, %v633, inf
    %639 = vmin.xlane.f32.xlu0 %v638
    %v640 = vpop.xlane.xlu0 %639
    %v641 = vcvt.f32.s32 %v640
    %v642 = vcvt.f32.s32 %v636
    %v643 = vshll.u32 %v642, 16
    %v644 = vadd.s32 %v643, %v641
    %vm645 = vcmask 31768
    %646 = vst.msk [vmem:[#allocation7] sm:$0xff] %vm645, %v628
    %647 = vst.msk [vmem:[#allocation8] sm:$0xff] %vm645, %v644
    %vm648 = vcmp.eq.s32.totalorder %v555, %v644
    %v649 = vsel %vm648, 1e+30, %v626
    %650 = vmin.xlane.f32.xlu0 %v649
    %v651 = vpop.xlane.xlu0 %650
    %vm652 = vcmp.eq.f32.partialorder %v649, %v651
    %v653 = vsel %vm652, %v555, 128
    %v654 = vand.u32 %v653, 65535
    %v655 = vshra.s32 %v653, 16
    %v656 = vcvt.s32.f32 %v654
    %v657 = vcvt.s32.f32 %v655
    %658 = vmin.xlane.f32.xlu0 %v657
    %v659 = vpop.xlane.xlu0 %658
    %vm660 = vcmp.eq.f32.partialorder %v657, %v659
    %v661 = vsel %vm660, %v656, inf
    %662 = vmin.xlane.f32.xlu0 %v661
    %v663 = vpop.xlane.xlu0 %662
    %v664 = vcvt.f32.s32 %v663
    %v665 = vcvt.f32.s32 %v659
    %v666 = vshll.u32 %v665, 16
    %v667 = vadd.s32 %v666, %v664
    %vm668 = vcmask 39968
    %669 = vst.msk [vmem:[#allocation7] sm:$0xff] %vm668, %v651
    %670 = vst.msk [vmem:[#allocation8] sm:$0xff] %vm668, %v667
    // Predicated region
    $region22: #{tpu_custom_call.1} parent=1 // pred_check
      _
    $region23: #{tpu_custom_call.1} parent=1 // pred_check_branch
      %672 = sbr.rel (0) target = $region25
    $region24: #{tpu_custom_call.1} parent=1 // pred_region
      %s674 = ssub.s32 128, 128
      %675 = vsyncadd [#allocation4], %s674
      %s677 = sshll.u32 [#allocation7], 4
      %s678 = int_to_ptr.vmem [resolvable:$true] %s677
      %680 = dma.vmem_to_hbm [thread:$0]  %s678, 128, %s3, [#allocation4]
    $region25: #{tpu_custom_call.1} parent=1 // pred_fallthru
      _
    // Predicated region
    $region26: #{tpu_custom_call.1} parent=1 // pred_check
      _
    $region27: #{tpu_custom_call.1} parent=1 // pred_check_branch
      %682 = sbr.rel (0) target = $region29
    $region28: #{tpu_custom_call.1} parent=1 // pred_region
      %s684 = ssub.s32 128, 128
      %685 = vsyncadd [#allocation9], %s684
      %s687 = sshll.u32 [#allocation8], 4
      %s688 = int_to_ptr.vmem [resolvable:$true] %s687
      %690 = dma.vmem_to_hbm [thread:$0]  %s688, 128, %s4, [#allocation9]
    $region29: #{tpu_custom_call.1} parent=1 // pred_fallthru
      _
    // Predicated region
    $region30: #{tpu_custom_call.1} parent=1 // pred_check
      _
    $region31: #{tpu_custom_call.1} parent=1 // pred_check_branch
      %692 = sbr.rel (0) target = $region33
    $region32: #{tpu_custom_call.1} parent=1 // pred_region
      %693 = dma.done [#allocation4], 128
    $region33: #{tpu_custom_call.1} parent=1 // pred_fallthru
      _
    // Predicated region
    $region34: #{tpu_custom_call.1} parent=1 // pred_check
      _
    $region35: #{tpu_custom_call.1} parent=1 // pred_check_branch
      %695 = sbr.rel (0) target = $region37
    $region36: #{tpu_custom_call.1} parent=1 // pred_region
      %696 = dma.done [#allocation9], 128
    $region37: #{tpu_custom_call.1} parent=1 // pred_fallthru
      _
    %697 = vsyncpa [#allocation3], 1
    %698 = vsyncpa [#allocation6], 1
    %699 = vsyncpa [#allocation4], 1
    %700 = vsyncpa [#allocation9], 1

</llo_original>
